<compile_context>
chip_gen: v5e
topology: v5e:2x2
jax: 0.10.0
libtpu: 0.0.40
codegen_flags: <defaults>
</compile_context>

<pallas_src>
import jax
import jax.numpy as jnp
from jax import lax
from jax.experimental import pallas as pl
from jax.experimental.pallas import tpu as pltpu

# ---------------------------------------------------------------------------
# Problem sizes (small, consistent with the module's forward)
# ---------------------------------------------------------------------------
B = 2            # batch
N = 8            # points per batch element
D_IN = 16        # input features of x
INTERM = 32      # implicit_layer.interm_channels
OUT_CH = 4       # output_channels of output_map
NUM_STEPS = 24   # fixed-point iterations ("forward_steps")

M = B * N        # rows seen by the kernel
LANES = 128      # lane-dense width for all in/out slabs


def _align8(n):
    return ((n + 7) // 8) * 8


# Row layout of the packed input slab (everything starts sublane-aligned).
X_R = 0                              # x      : rows [X_R, X_R+M),     cols [0, D_IN)
WX_R = _align8(X_R + M)              # Wx pad : rows [WX_R, +128), wx at [0:D_IN, 0:INTERM)
WZ_R = _align8(WX_R + LANES)         # Wz pad : rows [WZ_R, +128), wz at [0:INTERM, 0:INTERM)
B_R = _align8(WZ_R + LANES)          # b      : 1 row, cols [0, INTERM)
WOUT_R = _align8(B_R + 1)            # Wout pad: rows [WOUT_R, +128), wout at [0:INTERM, INTERM:INTERM+OUT_CH)
BOUT_R = _align8(WOUT_R + LANES)     # bout   : 1 row, cols [INTERM, INTERM+OUT_CH)
SLAB_ROWS = _align8(BOUT_R + 1)      # = 416


# ---------------------------------------------------------------------------
# Pallas kernel: injection + fixed-point solve + output linear map
# ---------------------------------------------------------------------------
def deq_kernel(slab_ref, out_ref):
    # Hoisted, full-lane reads of the packed operands (loaded once).
    x = slab_ref[X_R:X_R + M, :]                 # (M, 128), x in lanes [0, D_IN)
    wxp = slab_ref[WX_R:WX_R + LANES, :]         # (128, 128)
    wzp = slab_ref[WZ_R:WZ_R + LANES, :]         # (128, 128)
    bp = slab_ref[B_R:B_R + 1, :]                # (1, 128)
    woutp = slab_ref[WOUT_R:WOUT_R + LANES, :]   # (128, 128)
    boutp = slab_ref[BOUT_R:BOUT_R + 1, :]       # (1, 128)

    # Input injection (computed once): lanes [0, INTERM) = x @ Wx + b, rest 0.
    inj = jnp.dot(x, wxp, preferred_element_type=jnp.float32) + bp   # (M, 128)

    # Fixed-point iteration z <- tanh(z @ Wz + inj), z0 = 0.  Padded lanes
    # stay exactly zero throughout.  Loop fully unrolled; wzp closed over.
    def body(_, z):
        return jnp.tanh(jnp.dot(z, wzp, preferred_element_type=jnp.float32) + inj)

    z_full = lax.fori_loop(0, NUM_STEPS, body, jnp.zeros_like(inj), unroll=True)

    # Output projection lands in lanes [INTERM, INTERM+OUT_CH); all other lanes
    # of `proj` are exact zeros, so adding z_full passes z* through exactly.
    proj = jnp.dot(z_full, woutp, preferred_element_type=jnp.float32) + boutp
    # Single unmasked lane-dense (M, 128) store: z* in [0,32), output in [32,36).
    out_ref[...] = z_full + proj


def _pack_slab(x2d, p):
    slab = jnp.zeros((SLAB_ROWS, LANES), jnp.float32)
    slab = slab.at[X_R:X_R + M, :D_IN].set(x2d)
    slab = slab.at[WX_R:WX_R + D_IN, :INTERM].set(p["wx"])
    slab = slab.at[WZ_R:WZ_R + INTERM, :INTERM].set(p["wz"])
    slab = slab.at[B_R, :INTERM].set(p["b"][0])
    slab = slab.at[WOUT_R:WOUT_R + INTERM, INTERM:INTERM + OUT_CH].set(p["wout"])
    slab = slab.at[BOUT_R, INTERM:INTERM + OUT_CH].set(p["bout"][0])
    return slab


@jax.jit
def deq_implicit_nn_forward(x, params):
    """Mirrors DEQImplicitNN.forward(x) with z=None, skip_solver=False."""
    b, n, d_in = x.shape
    m = b * n
    x2d = x.reshape(m, d_in).astype(jnp.float32)
    slab = _pack_slab(x2d, params)

    cost = pl.CostEstimate(
        flops=2 * M * LANES * LANES * (NUM_STEPS + 2),
        transcendentals=NUM_STEPS * M * LANES,
        bytes_accessed=(SLAB_ROWS + M) * LANES * 4,
    )

    vmem = pl.BlockSpec(memory_space=pltpu.MemorySpace.VMEM)
    out_slab = pl.pallas_call(
        deq_kernel,
        out_shape=jax.ShapeDtypeStruct((M, LANES), jnp.float32),
        in_specs=[vmem],
        out_specs=vmem,
        cost_estimate=cost,
    )(slab)

    z_star = out_slab[:, :INTERM].reshape(b, n, INTERM)
    out = out_slab[:, INTERM:INTERM + OUT_CH].reshape(b, n, OUT_CH)

    # TODO(synk): include_grad path (torch.autograd.grad w.r.t. x) not lowered
    # to Pallas; use jax.grad on this wrapper if gradients are needed.
    return {
        "output": out,
        "imp_layer_output": z_star,
        "forward_steps": NUM_STEPS,
    }


# ---------------------------------------------------------------------------
# Deterministic parameter init (PyTorch-Linear-style uniform fan-in scaling)
# ---------------------------------------------------------------------------
def init_params():
    ks = jax.random.split(jax.random.PRNGKey(42), 5)

    def u(key, shape, fan_in):
        bound = 1.0 / jnp.sqrt(fan_in)
        return jax.random.uniform(key, shape, jnp.float32, -bound, bound)

    return {
        "wx": u(ks[0], (D_IN, INTERM), D_IN),
        # scale recurrent weight down so tanh fixed-point is a contraction
        "wz": 0.5 * u(ks[1], (INTERM, INTERM), INTERM),
        "b": u(ks[2], (1, INTERM), INTERM),
        "wout": u(ks[3], (INTERM, OUT_CH), INTERM),
        "bout": u(ks[4], (1, OUT_CH), INTERM),
    }


# Pure-JAX reference for correctness checking
def reference_forward(x, p):
    m = x.shape[0] * x.shape[1]
    x2d = x.reshape(m, D_IN).astype(jnp.float32)
    inj = x2d @ p["wx"] + p["b"]
    z = jnp.zeros((m, INTERM), jnp.float32)
    for _ in range(NUM_STEPS):
        z = jnp.tanh(z @ p["wz"] + inj)
    out = z @ p["wout"] + p["bout"]
    return (out.reshape(x.shape[0], x.shape[1], OUT_CH),
            z.reshape(x.shape[0], x.shape[1], INTERM))


if __name__ == "__main__":
    key = jax.random.PRNGKey(0)
    x = jax.random.normal(key, (B, N, D_IN), jnp.float32)
    params = init_params()

    ret = deq_implicit_nn_forward(x, params)
    jax.block_until_ready(ret["output"])
    jax.block_until_ready(ret["imp_layer_output"])

    out_ref, z_ref = reference_forward(x, params)
    assert ret["output"].shape == (B, N, OUT_CH)
    assert ret["imp_layer_output"].shape == (B, N, INTERM)
    assert int(ret["forward_steps"]) == NUM_STEPS
    assert jnp.allclose(ret["output"], out_ref, atol=5e-5, rtol=5e-5)
    assert jnp.allclose(ret["imp_layer_output"], z_ref, atol=5e-5, rtol=5e-5)

    print("KERNEL_OK")
</pallas_src>

<mosaic_0001>
module attributes {stable_mosaic.version = 11 : i64} {
  func.func @deq_kernel(%arg0: memref<416x128xf32, #tpu.memory_space<vmem>>, %arg1: memref<16x128xf32, #tpu.memory_space<vmem>>) attributes {dimension_semantics = [], scalar_prefetch = 0 : i64, scratch_operands = 0 : i64, tpu.core_type = #tpu.core_type<tc>} {
    %c0 = arith.constant 0 : index
    %c0_0 = arith.constant 0 : index
    %0 = vector.load %arg0[%c0, %c0_0] : memref<416x128xf32, #tpu.memory_space<vmem>>, vector<16x128xf32>
    %c16 = arith.constant 16 : index
    %c0_1 = arith.constant 0 : index
    %1 = vector.load %arg0[%c16, %c0_1] : memref<416x128xf32, #tpu.memory_space<vmem>>, vector<128x128xf32>
    %c144 = arith.constant 144 : index
    %c0_2 = arith.constant 0 : index
    %2 = vector.load %arg0[%c144, %c0_2] : memref<416x128xf32, #tpu.memory_space<vmem>>, vector<128x128xf32>
    %c272 = arith.constant 272 : index
    %c0_3 = arith.constant 0 : index
    %3 = vector.load %arg0[%c272, %c0_3] : memref<416x128xf32, #tpu.memory_space<vmem>>, vector<1x128xf32>
    %c280 = arith.constant 280 : index
    %c0_4 = arith.constant 0 : index
    %4 = vector.load %arg0[%c280, %c0_4] : memref<416x128xf32, #tpu.memory_space<vmem>>, vector<128x128xf32>
    %c408 = arith.constant 408 : index
    %c0_5 = arith.constant 0 : index
    %5 = vector.load %arg0[%c408, %c0_5] : memref<416x128xf32, #tpu.memory_space<vmem>>, vector<1x128xf32>
    %cst = arith.constant dense<0.000000e+00> : vector<16x128xf32>
    %6 = tpu.matmul %0, %1, %cst {dimension_numbers = #tpu.dot_dimension_numbers<[1], [0], [0], [1], [0, 0, 1, 1], [], []>} : vector<16x128xf32>, vector<128x128xf32>, vector<16x128xf32> -> vector<16x128xf32>
    %7 = vector.broadcast %3 : vector<1x128xf32> to vector<16x128xf32>
    %8 = arith.addf %6, %7 : vector<16x128xf32>
    %cst_6 = arith.constant 0.000000e+00 : f32
    %9 = vector.broadcast %cst_6 : f32 to vector<16x128xf32>
    %c0_i32 = arith.constant 0 : i32
    %cst_7 = arith.constant dense<0.000000e+00> : vector<16x128xf32>
    %10 = tpu.matmul %9, %2, %cst_7 {dimension_numbers = #tpu.dot_dimension_numbers<[1], [0], [0], [1], [0, 0, 1, 1], [], []>} : vector<16x128xf32>, vector<128x128xf32>, vector<16x128xf32> -> vector<16x128xf32>
    %11 = arith.addf %10, %8 : vector<16x128xf32>
    %12 = math.tanh %11 : vector<16x128xf32>
    %c1_i32 = arith.constant 1 : i32
    %cst_8 = arith.constant dense<0.000000e+00> : vector<16x128xf32>
    %13 = tpu.matmul %12, %2, %cst_8 {dimension_numbers = #tpu.dot_dimension_numbers<[1], [0], [0], [1], [0, 0, 1, 1], [], []>} : vector<16x128xf32>, vector<128x128xf32>, vector<16x128xf32> -> vector<16x128xf32>
    %14 = arith.addf %13, %8 : vector<16x128xf32>
    %15 = math.tanh %14 : vector<16x128xf32>
    %c2_i32 = arith.constant 2 : i32
    %cst_9 = arith.constant dense<0.000000e+00> : vector<16x128xf32>
    %16 = tpu.matmul %15, %2, %cst_9 {dimension_numbers = #tpu.dot_dimension_numbers<[1], [0], [0], [1], [0, 0, 1, 1], [], []>} : vector<16x128xf32>, vector<128x128xf32>, vector<16x128xf32> -> vector<16x128xf32>
    %17 = arith.addf %16, %8 : vector<16x128xf32>
    %18 = math.tanh %17 : vector<16x128xf32>
    %c3_i32 = arith.constant 3 : i32
    %cst_10 = arith.constant dense<0.000000e+00> : vector<16x128xf32>
    %19 = tpu.matmul %18, %2, %cst_10 {dimension_numbers = #tpu.dot_dimension_numbers<[1], [0], [0], [1], [0, 0, 1, 1], [], []>} : vector<16x128xf32>, vector<128x128xf32>, vector<16x128xf32> -> vector<16x128xf32>
    %20 = arith.addf %19, %8 : vector<16x128xf32>
    %21 = math.tanh %20 : vector<16x128xf32>
    %c4_i32 = arith.constant 4 : i32
    %cst_11 = arith.constant dense<0.000000e+00> : vector<16x128xf32>
    %22 = tpu.matmul %21, %2, %cst_11 {dimension_numbers = #tpu.dot_dimension_numbers<[1], [0], [0], [1], [0, 0, 1, 1], [], []>} : vector<16x128xf32>, vector<128x128xf32>, vector<16x128xf32> -> vector<16x128xf32>
    %23 = arith.addf %22, %8 : vector<16x128xf32>
    %24 = math.tanh %23 : vector<16x128xf32>
    %c5_i32 = arith.constant 5 : i32
    %cst_12 = arith.constant dense<0.000000e+00> : vector<16x128xf32>
    %25 = tpu.matmul %24, %2, %cst_12 {dimension_numbers = #tpu.dot_dimension_numbers<[1], [0], [0], [1], [0, 0, 1, 1], [], []>} : vector<16x128xf32>, vector<128x128xf32>, vector<16x128xf32> -> vector<16x128xf32>
    %26 = arith.addf %25, %8 : vector<16x128xf32>
    %27 = math.tanh %26 : vector<16x128xf32>
    %c6_i32 = arith.constant 6 : i32
    %cst_13 = arith.constant dense<0.000000e+00> : vector<16x128xf32>
    %28 = tpu.matmul %27, %2, %cst_13 {dimension_numbers = #tpu.dot_dimension_numbers<[1], [0], [0], [1], [0, 0, 1, 1], [], []>} : vector<16x128xf32>, vector<128x128xf32>, vector<16x128xf32> -> vector<16x128xf32>
    %29 = arith.addf %28, %8 : vector<16x128xf32>
    %30 = math.tanh %29 : vector<16x128xf32>
    %c7_i32 = arith.constant 7 : i32
    %cst_14 = arith.constant dense<0.000000e+00> : vector<16x128xf32>
    %31 = tpu.matmul %30, %2, %cst_14 {dimension_numbers = #tpu.dot_dimension_numbers<[1], [0], [0], [1], [0, 0, 1, 1], [], []>} : vector<16x128xf32>, vector<128x128xf32>, vector<16x128xf32> -> vector<16x128xf32>
    %32 = arith.addf %31, %8 : vector<16x128xf32>
    %33 = math.tanh %32 : vector<16x128xf32>
    %c8_i32 = arith.constant 8 : i32
    %cst_15 = arith.constant dense<0.000000e+00> : vector<16x128xf32>
    %34 = tpu.matmul %33, %2, %cst_15 {dimension_numbers = #tpu.dot_dimension_numbers<[1], [0], [0], [1], [0, 0, 1, 1], [], []>} : vector<16x128xf32>, vector<128x128xf32>, vector<16x128xf32> -> vector<16x128xf32>
    %35 = arith.addf %34, %8 : vector<16x128xf32>
    %36 = math.tanh %35 : vector<16x128xf32>
    %c9_i32 = arith.constant 9 : i32
    %cst_16 = arith.constant dense<0.000000e+00> : vector<16x128xf32>
    %37 = tpu.matmul %36, %2, %cst_16 {dimension_numbers = #tpu.dot_dimension_numbers<[1], [0], [0], [1], [0, 0, 1, 1], [], []>} : vector<16x128xf32>, vector<128x128xf32>, vector<16x128xf32> -> vector<16x128xf32>
    %38 = arith.addf %37, %8 : vector<16x128xf32>
    %39 = math.tanh %38 : vector<16x128xf32>
    %c10_i32 = arith.constant 10 : i32
    %cst_17 = arith.constant dense<0.000000e+00> : vector<16x128xf32>
    %40 = tpu.matmul %39, %2, %cst_17 {dimension_numbers = #tpu.dot_dimension_numbers<[1], [0], [0], [1], [0, 0, 1, 1], [], []>} : vector<16x128xf32>, vector<128x128xf32>, vector<16x128xf32> -> vector<16x128xf32>
    %41 = arith.addf %40, %8 : vector<16x128xf32>
    %42 = math.tanh %41 : vector<16x128xf32>
    %c11_i32 = arith.constant 11 : i32
    %cst_18 = arith.constant dense<0.000000e+00> : vector<16x128xf32>
    %43 = tpu.matmul %42, %2, %cst_18 {dimension_numbers = #tpu.dot_dimension_numbers<[1], [0], [0], [1], [0, 0, 1, 1], [], []>} : vector<16x128xf32>, vector<128x128xf32>, vector<16x128xf32> -> vector<16x128xf32>
    %44 = arith.addf %43, %8 : vector<16x128xf32>
    %45 = math.tanh %44 : vector<16x128xf32>
    %c12_i32 = arith.constant 12 : i32
    %cst_19 = arith.constant dense<0.000000e+00> : vector<16x128xf32>
    %46 = tpu.matmul %45, %2, %cst_19 {dimension_numbers = #tpu.dot_dimension_numbers<[1], [0], [0], [1], [0, 0, 1, 1], [], []>} : vector<16x128xf32>, vector<128x128xf32>, vector<16x128xf32> -> vector<16x128xf32>
    %47 = arith.addf %46, %8 : vector<16x128xf32>
    %48 = math.tanh %47 : vector<16x128xf32>
    %c13_i32 = arith.constant 13 : i32
    %cst_20 = arith.constant dense<0.000000e+00> : vector<16x128xf32>
    %49 = tpu.matmul %48, %2, %cst_20 {dimension_numbers = #tpu.dot_dimension_numbers<[1], [0], [0], [1], [0, 0, 1, 1], [], []>} : vector<16x128xf32>, vector<128x128xf32>, vector<16x128xf32> -> vector<16x128xf32>
    %50 = arith.addf %49, %8 : vector<16x128xf32>
    %51 = math.tanh %50 : vector<16x128xf32>
    %c14_i32 = arith.constant 14 : i32
    %cst_21 = arith.constant dense<0.000000e+00> : vector<16x128xf32>
    %52 = tpu.matmul %51, %2, %cst_21 {dimension_numbers = #tpu.dot_dimension_numbers<[1], [0], [0], [1], [0, 0, 1, 1], [], []>} : vector<16x128xf32>, vector<128x128xf32>, vector<16x128xf32> -> vector<16x128xf32>
    %53 = arith.addf %52, %8 : vector<16x128xf32>
    %54 = math.tanh %53 : vector<16x128xf32>
    %c15_i32 = arith.constant 15 : i32
    %cst_22 = arith.constant dense<0.000000e+00> : vector<16x128xf32>
    %55 = tpu.matmul %54, %2, %cst_22 {dimension_numbers = #tpu.dot_dimension_numbers<[1], [0], [0], [1], [0, 0, 1, 1], [], []>} : vector<16x128xf32>, vector<128x128xf32>, vector<16x128xf32> -> vector<16x128xf32>
    %56 = arith.addf %55, %8 : vector<16x128xf32>
    %57 = math.tanh %56 : vector<16x128xf32>
    %c16_i32 = arith.constant 16 : i32
    %cst_23 = arith.constant dense<0.000000e+00> : vector<16x128xf32>
    %58 = tpu.matmul %57, %2, %cst_23 {dimension_numbers = #tpu.dot_dimension_numbers<[1], [0], [0], [1], [0, 0, 1, 1], [], []>} : vector<16x128xf32>, vector<128x128xf32>, vector<16x128xf32> -> vector<16x128xf32>
    %59 = arith.addf %58, %8 : vector<16x128xf32>
    %60 = math.tanh %59 : vector<16x128xf32>
    %c17_i32 = arith.constant 17 : i32
    %cst_24 = arith.constant dense<0.000000e+00> : vector<16x128xf32>
    %61 = tpu.matmul %60, %2, %cst_24 {dimension_numbers = #tpu.dot_dimension_numbers<[1], [0], [0], [1], [0, 0, 1, 1], [], []>} : vector<16x128xf32>, vector<128x128xf32>, vector<16x128xf32> -> vector<16x128xf32>
    %62 = arith.addf %61, %8 : vector<16x128xf32>
    %63 = math.tanh %62 : vector<16x128xf32>
    %c18_i32 = arith.constant 18 : i32
    %cst_25 = arith.constant dense<0.000000e+00> : vector<16x128xf32>
    %64 = tpu.matmul %63, %2, %cst_25 {dimension_numbers = #tpu.dot_dimension_numbers<[1], [0], [0], [1], [0, 0, 1, 1], [], []>} : vector<16x128xf32>, vector<128x128xf32>, vector<16x128xf32> -> vector<16x128xf32>
    %65 = arith.addf %64, %8 : vector<16x128xf32>
    %66 = math.tanh %65 : vector<16x128xf32>
    %c19_i32 = arith.constant 19 : i32
    %cst_26 = arith.constant dense<0.000000e+00> : vector<16x128xf32>
    %67 = tpu.matmul %66, %2, %cst_26 {dimension_numbers = #tpu.dot_dimension_numbers<[1], [0], [0], [1], [0, 0, 1, 1], [], []>} : vector<16x128xf32>, vector<128x128xf32>, vector<16x128xf32> -> vector<16x128xf32>
    %68 = arith.addf %67, %8 : vector<16x128xf32>
    %69 = math.tanh %68 : vector<16x128xf32>
    %c20_i32 = arith.constant 20 : i32
    %cst_27 = arith.constant dense<0.000000e+00> : vector<16x128xf32>
    %70 = tpu.matmul %69, %2, %cst_27 {dimension_numbers = #tpu.dot_dimension_numbers<[1], [0], [0], [1], [0, 0, 1, 1], [], []>} : vector<16x128xf32>, vector<128x128xf32>, vector<16x128xf32> -> vector<16x128xf32>
    %71 = arith.addf %70, %8 : vector<16x128xf32>
    %72 = math.tanh %71 : vector<16x128xf32>
    %c21_i32 = arith.constant 21 : i32
    %cst_28 = arith.constant dense<0.000000e+00> : vector<16x128xf32>
    %73 = tpu.matmul %72, %2, %cst_28 {dimension_numbers = #tpu.dot_dimension_numbers<[1], [0], [0], [1], [0, 0, 1, 1], [], []>} : vector<16x128xf32>, vector<128x128xf32>, vector<16x128xf32> -> vector<16x128xf32>
    %74 = arith.addf %73, %8 : vector<16x128xf32>
    %75 = math.tanh %74 : vector<16x128xf32>
    %c22_i32 = arith.constant 22 : i32
    %cst_29 = arith.constant dense<0.000000e+00> : vector<16x128xf32>
    %76 = tpu.matmul %75, %2, %cst_29 {dimension_numbers = #tpu.dot_dimension_numbers<[1], [0], [0], [1], [0, 0, 1, 1], [], []>} : vector<16x128xf32>, vector<128x128xf32>, vector<16x128xf32> -> vector<16x128xf32>
    %77 = arith.addf %76, %8 : vector<16x128xf32>
    %78 = math.tanh %77 : vector<16x128xf32>
    %c23_i32 = arith.constant 23 : i32
    %cst_30 = arith.constant dense<0.000000e+00> : vector<16x128xf32>
    %79 = tpu.matmul %78, %2, %cst_30 {dimension_numbers = #tpu.dot_dimension_numbers<[1], [0], [0], [1], [0, 0, 1, 1], [], []>} : vector<16x128xf32>, vector<128x128xf32>, vector<16x128xf32> -> vector<16x128xf32>
    %80 = arith.addf %79, %8 : vector<16x128xf32>
    %81 = math.tanh %80 : vector<16x128xf32>
    %cst_31 = arith.constant dense<0.000000e+00> : vector<16x128xf32>
    %82 = tpu.matmul %81, %4, %cst_31 {dimension_numbers = #tpu.dot_dimension_numbers<[1], [0], [0], [1], [0, 0, 1, 1], [], []>} : vector<16x128xf32>, vector<128x128xf32>, vector<16x128xf32> -> vector<16x128xf32>
    %83 = vector.broadcast %5 : vector<1x128xf32> to vector<16x128xf32>
    %84 = arith.addf %82, %83 : vector<16x128xf32>
    %85 = arith.addf %81, %84 : vector<16x128xf32>
    %c0_32 = arith.constant 0 : index
    %c0_33 = arith.constant 0 : index
    %86 = vector.load %arg1[%c0_32, %c0_33] : memref<16x128xf32, #tpu.memory_space<vmem>>, vector<16x128xf32>
    tpu.vector_store %arg1[%c0_32, %c0_33], %85 {strides = array<i32>} : memref<16x128xf32, #tpu.memory_space<vmem>>, vector<16x128xf32>,
    return
  }
}

</mosaic_0001>

<llo_original>
// kernel: deq_implicit_nn_forward.1
$region0: #{deq_implicit_nn_forward.1}
  #allocation0 [shape = 'u32[]', space=smem, size = 0x4, offset = 0x4, fixed_abs, tag = 'smem constant byte address 0x4 - core index']
  #allocation1 [shape = 'u32[72,128]{1,0:T(1,128)}', space=vmem, size = 0x9000, scoped, tag = 'internal scratch']
  %s0 = inlined_call_operand.vmem [shape: f32[416,128], index: 0, kind: input, shape index: {}]
  %s1 = inlined_call_operand.vmem [shape: f32[16,128], index: 1, kind: output, shape index: {}]
  %s2 = sld [smem:[#allocation0]]
  $region14: #{deq_implicit_nn_forward.1} parent=0
    _
  %s4 = ssub.s32 1, %s2
  %s5 = scalar_select 0, %s4, %s2
  // Predicated region
  $region2: #{deq_implicit_nn_forward.1} parent=0 // pred_check
    _
  $region3: #{deq_implicit_nn_forward.1} parent=0 // pred_check_branch
    %7 = sbr.rel (0) target = $region5
  $region4: #{deq_implicit_nn_forward.1} parent=0 // pred_region
    _
  $region5: #{deq_implicit_nn_forward.1} parent=0 // pred_fallthru
    _
  %v8 = vld [vmem:[%s0] sm:$0xff]
  %v9 = vld [vmem:[%s0 + $0x8] sm:$0xff]
  %v10 = vld [vmem:[%s0 + $0x10] sm:$0xff]
  %v11 = vld [vmem:[%s0 + $0x18] sm:$0xff]
  %v12 = vld [vmem:[%s0 + $0x20] sm:$0xff]
  %v13 = vld [vmem:[%s0 + $0x28] sm:$0xff]
  %v14 = vld [vmem:[%s0 + $0x30] sm:$0xff]
  %v15 = vld [vmem:[%s0 + $0x38] sm:$0xff]
  %v16 = vld [vmem:[%s0 + $0x40] sm:$0xff]
  %v17 = vld [vmem:[%s0 + $0x48] sm:$0xff]
  %v18 = vld [vmem:[%s0 + $0x50] sm:$0xff]
  %v19 = vld [vmem:[%s0 + $0x58] sm:$0xff]
  %v20 = vld [vmem:[%s0 + $0x60] sm:$0xff]
  %v21 = vld [vmem:[%s0 + $0x68] sm:$0xff]
  %v22 = vld [vmem:[%s0 + $0x70] sm:$0xff]
  %v23 = vld [vmem:[%s0 + $0x78] sm:$0xff]
  %v24 = vld [vmem:[%s0 + $0x80] sm:$0xff]
  %v25 = vld [vmem:[%s0 + $0x88] sm:$0xff]
  %v26 = vld [vmem:[%s0 + $0x90] sm:$0xff]
  %v27 = vld [vmem:[%s0 + $0x98] sm:$0xff]
  %v28 = vld [vmem:[%s0 + $0xa0] sm:$0xff]
  %v29 = vld [vmem:[%s0 + $0xa8] sm:$0xff]
  %v30 = vld [vmem:[%s0 + $0xb0] sm:$0xff]
  %v31 = vld [vmem:[%s0 + $0xb8] sm:$0xff]
  %v32 = vld [vmem:[%s0 + $0xc0] sm:$0xff]
  %v33 = vld [vmem:[%s0 + $0xc8] sm:$0xff]
  %v34 = vld [vmem:[%s0 + $0xd0] sm:$0xff]
  %v35 = vld [vmem:[%s0 + $0xd8] sm:$0xff]
  %v36 = vld [vmem:[%s0 + $0xe0] sm:$0xff]
  %v37 = vld [vmem:[%s0 + $0xe8] sm:$0xff]
  %v38 = vld [vmem:[%s0 + $0xf0] sm:$0xff]
  %v39 = vld [vmem:[%s0 + $0xf8] sm:$0xff]
  %v40 = vld [vmem:[%s0 + $0x100] sm:$0xff]
  %v41 = vld [vmem:[%s0 + $0x108] sm:$0xff]
  %v42 = vld [vmem:[%s0 + $0x110] sm:$0x1]
  %v43 = vld [vmem:[%s0 + $0x118] sm:$0xff]
  %v44 = vld [vmem:[%s0 + $0x120] sm:$0xff]
  %v45 = vld [vmem:[%s0 + $0x128] sm:$0xff]
  %v46 = vld [vmem:[%s0 + $0x130] sm:$0xff]
  %v47 = vld [vmem:[%s0 + $0x138] sm:$0xff]
  %v48 = vld [vmem:[%s0 + $0x140] sm:$0xff]
  %v49 = vld [vmem:[%s0 + $0x148] sm:$0xff]
  %v50 = vld [vmem:[%s0 + $0x150] sm:$0xff]
  %v51 = vld [vmem:[%s0 + $0x158] sm:$0xff]
  %v52 = vld [vmem:[%s0 + $0x160] sm:$0xff]
  %v53 = vld [vmem:[%s0 + $0x168] sm:$0xff]
  %v54 = vld [vmem:[%s0 + $0x170] sm:$0xff]
  %v55 = vld [vmem:[%s0 + $0x178] sm:$0xff]
  %v56 = vld [vmem:[%s0 + $0x180] sm:$0xff]
  %v57 = vld [vmem:[%s0 + $0x188] sm:$0xff]
  %v58 = vld [vmem:[%s0 + $0x190] sm:$0xff]
  %v59 = vld [vmem:[%s0 + $0x198] sm:$0x1]
  %v60 = vperm.slane %v42, 0
  %61 = vmatpush.msra.mxu0 %v25
  %62 = vmatpush.msra.mxu0 %v24
  %63 = vmatpush.msra.mxu0 %v23
  %64 = vmatpush.msra.mxu0 %v22
  %65 = vmatpush.msra.mxu0 %v21
  %66 = vmatpush.msra.mxu0 %v20
  %67 = vmatpush.msra.mxu0 %v19
  %68 = vmatpush.msra.mxu0 %v18
  %69 = vmatpush.msra.mxu0 %v17
  %70 = vmatpush.msra.mxu0 %v16
  %71 = vmatpush.msra.mxu0 %v15
  %72 = vmatpush.msra.mxu0 %v14
  %73 = vmatpush.msra.mxu0 %v13
  %74 = vmatpush.msra.mxu0 %v12
  %75 = vmatpush.msra.mxu0 %v11
  %76 = vmatpush.msra.mxu0 %v10
  %77 = vmatmul.f32.gmra.mxu0 %v8
  %v78 = vpop.f32.mrf.mxu0
  %v79 = vadd.f32 %v60, %v78
  %80 = vmatmul.f32.gmra.mxu0 %v9
  %v81 = vpop.f32.mrf.mxu0
  %v82 = vadd.f32 %v60, %v81
  %83 = vdwg.mxu0
  %84 = vmatpush.msra.mxu0 %v41
  %85 = vmatpush.msra.mxu0 %v40
  %86 = vmatpush.msra.mxu0 %v39
  %87 = vmatpush.msra.mxu0 %v38
  %88 = vmatpush.msra.mxu0 %v37
  %89 = vmatpush.msra.mxu0 %v36
  %90 = vmatpush.msra.mxu0 %v35
  %91 = vmatpush.msra.mxu0 %v34
  %92 = vmatpush.msra.mxu0 %v33
  %93 = vmatpush.msra.mxu0 %v32
  %94 = vmatpush.msra.mxu0 %v31
  %95 = vmatpush.msra.mxu0 %v30
  %96 = vmatpush.msra.mxu0 %v29
  %97 = vmatpush.msra.mxu0 %v28
  %98 = vmatpush.msra.mxu0 %v27
  %99 = vmatpush.msra.mxu0 %v26
  %100 = vmatmul.f32.gmra.mxu0 0.0
  %v101 = vpop.f32.mrf.mxu0
  %v102 = vadd.f32 %v79, %v101
  %103 = vmatmul.f32.gmra.mxu0 0.0
  %v104 = vpop.f32.mrf.mxu0
  %v105 = vadd.f32 %v82, %v104
  %106 = vdwg.mxu0
  %v107 = vtanh.pop %v102
  %v108 = vtanh.pop %v105
  %109 = vmatpush.msra.mxu0 %v41
  %110 = vmatpush.msra.mxu0 %v40
  %111 = vmatpush.msra.mxu0 %v39
  %112 = vmatpush.msra.mxu0 %v38
  %113 = vmatpush.msra.mxu0 %v37
  %114 = vmatpush.msra.mxu0 %v36
  %115 = vmatpush.msra.mxu0 %v35
  %116 = vmatpush.msra.mxu0 %v34
  %117 = vmatpush.msra.mxu0 %v33
  %118 = vmatpush.msra.mxu0 %v32
  %119 = vmatpush.msra.mxu0 %v31
  %120 = vmatpush.msra.mxu0 %v30
  %121 = vmatpush.msra.mxu0 %v29
  %122 = vmatpush.msra.mxu0 %v28
  %123 = vmatpush.msra.mxu0 %v27
  %124 = vmatpush.msra.mxu0 %v26
  %125 = vmatmul.f32.gmra.mxu0 %v107
  %v126 = vpop.f32.mrf.mxu0
  %v127 = vadd.f32 %v79, %v126
  %128 = vmatmul.f32.gmra.mxu0 %v108
  %v129 = vpop.f32.mrf.mxu0
  %v130 = vadd.f32 %v82, %v129
  %131 = vdwg.mxu0
  %v132 = vtanh.pop %v127
  %v133 = vtanh.pop %v130
  %134 = vmatpush.msra.mxu0 %v41
  %135 = vmatpush.msra.mxu0 %v40
  %136 = vmatpush.msra.mxu0 %v39
  %137 = vmatpush.msra.mxu0 %v38
  %138 = vmatpush.msra.mxu0 %v37
  %139 = vmatpush.msra.mxu0 %v36
  %140 = vmatpush.msra.mxu0 %v35
  %141 = vmatpush.msra.mxu0 %v34
  %142 = vmatpush.msra.mxu0 %v33
  %143 = vmatpush.msra.mxu0 %v32
  %144 = vmatpush.msra.mxu0 %v31
  %145 = vmatpush.msra.mxu0 %v30
  %146 = vmatpush.msra.mxu0 %v29
  %147 = vmatpush.msra.mxu0 %v28
  %148 = vmatpush.msra.mxu0 %v27
  %149 = vmatpush.msra.mxu0 %v26
  %150 = vmatmul.f32.gmra.mxu0 %v132
  %v151 = vpop.f32.mrf.mxu0
  %v152 = vadd.f32 %v79, %v151
  %153 = vmatmul.f32.gmra.mxu0 %v133
  %v154 = vpop.f32.mrf.mxu0
  %v155 = vadd.f32 %v82, %v154
  %156 = vdwg.mxu0
  %v157 = vtanh.pop %v152
  %v158 = vtanh.pop %v155
  %159 = vmatpush.msra.mxu0 %v41
  %160 = vmatpush.msra.mxu0 %v40
  %161 = vmatpush.msra.mxu0 %v39
  %162 = vmatpush.msra.mxu0 %v38
  %163 = vmatpush.msra.mxu0 %v37
  %164 = vmatpush.msra.mxu0 %v36
  %165 = vmatpush.msra.mxu0 %v35
  %166 = vmatpush.msra.mxu0 %v34
  %167 = vmatpush.msra.mxu0 %v33
  %168 = vmatpush.msra.mxu0 %v32
  %169 = vmatpush.msra.mxu0 %v31
  %170 = vmatpush.msra.mxu0 %v30
  %171 = vmatpush.msra.mxu0 %v29
  %172 = vmatpush.msra.mxu0 %v28
  %173 = vmatpush.msra.mxu0 %v27
  %174 = vmatpush.msra.mxu0 %v26
  %175 = vmatmul.f32.gmra.mxu0 %v157
  %v176 = vpop.f32.mrf.mxu0
  %v177 = vadd.f32 %v79, %v176
  %178 = vmatmul.f32.gmra.mxu0 %v158
  %v179 = vpop.f32.mrf.mxu0
  %v180 = vadd.f32 %v82, %v179
  %181 = vdwg.mxu0
  %v182 = vtanh.pop %v177
  %v183 = vtanh.pop %v180
  %184 = vmatpush.msra.mxu0 %v41
  %185 = vmatpush.msra.mxu0 %v40
  %186 = vmatpush.msra.mxu0 %v39
  %187 = vmatpush.msra.mxu0 %v38
  %188 = vmatpush.msra.mxu0 %v37
  %189 = vmatpush.msra.mxu0 %v36
  %190 = vmatpush.msra.mxu0 %v35
  %191 = vmatpush.msra.mxu0 %v34
  %192 = vmatpush.msra.mxu0 %v33
  %193 = vmatpush.msra.mxu0 %v32
  %194 = vmatpush.msra.mxu0 %v31
  %195 = vmatpush.msra.mxu0 %v30
  %196 = vmatpush.msra.mxu0 %v29
  %197 = vmatpush.msra.mxu0 %v28
  %198 = vmatpush.msra.mxu0 %v27
  %199 = vmatpush.msra.mxu0 %v26
  %200 = vmatmul.f32.gmra.mxu0 %v182
  %v201 = vpop.f32.mrf.mxu0
  %v202 = vadd.f32 %v79, %v201
  %203 = vmatmul.f32.gmra.mxu0 %v183
  %v204 = vpop.f32.mrf.mxu0
  %v205 = vadd.f32 %v82, %v204
  %206 = vdwg.mxu0
  %v207 = vtanh.pop %v202
  %v208 = vtanh.pop %v205
  %209 = vmatpush.msra.mxu0 %v41
  %210 = vmatpush.msra.mxu0 %v40
  %211 = vmatpush.msra.mxu0 %v39
  %212 = vmatpush.msra.mxu0 %v38
  %213 = vmatpush.msra.mxu0 %v37
  %214 = vmatpush.msra.mxu0 %v36
  %215 = vmatpush.msra.mxu0 %v35
  %216 = vmatpush.msra.mxu0 %v34
  %217 = vmatpush.msra.mxu0 %v33
  %218 = vmatpush.msra.mxu0 %v32
  %219 = vmatpush.msra.mxu0 %v31
  %220 = vmatpush.msra.mxu0 %v30
  %221 = vmatpush.msra.mxu0 %v29
  %222 = vmatpush.msra.mxu0 %v28
  %223 = vmatpush.msra.mxu0 %v27
  %224 = vmatpush.msra.mxu0 %v26
  %225 = vmatmul.f32.gmra.mxu0 %v207
  %v226 = vpop.f32.mrf.mxu0
  %v227 = vadd.f32 %v79, %v226
  %228 = vmatmul.f32.gmra.mxu0 %v208
  %v229 = vpop.f32.mrf.mxu0
  %v230 = vadd.f32 %v82, %v229
  %231 = vdwg.mxu0
  %v232 = vtanh.pop %v227
  %v233 = vtanh.pop %v230
  %234 = vmatpush.msra.mxu0 %v41
  %235 = vmatpush.msra.mxu0 %v40
  %236 = vmatpush.msra.mxu0 %v39
  %237 = vmatpush.msra.mxu0 %v38
  %238 = vmatpush.msra.mxu0 %v37
  %239 = vmatpush.msra.mxu0 %v36
  %240 = vmatpush.msra.mxu0 %v35
  %241 = vmatpush.msra.mxu0 %v34
  %242 = vmatpush.msra.mxu0 %v33
  %243 = vmatpush.msra.mxu0 %v32
  %244 = vmatpush.msra.mxu0 %v31
  %245 = vmatpush.msra.mxu0 %v30
  %246 = vmatpush.msra.mxu0 %v29
  %247 = vmatpush.msra.mxu0 %v28
  %248 = vmatpush.msra.mxu0 %v27
  %249 = vmatpush.msra.mxu0 %v26
  %250 = vmatmul.f32.gmra.mxu0 %v232
  %v251 = vpop.f32.mrf.mxu0
  %v252 = vadd.f32 %v79, %v251
  %253 = vmatmul.f32.gmra.mxu0 %v233
  %v254 = vpop.f32.mrf.mxu0
  %v255 = vadd.f32 %v82, %v254
  %256 = vdwg.mxu0
  %v257 = vtanh.pop %v252
  %v258 = vtanh.pop %v255
  %259 = vmatpush.msra.mxu0 %v41
  %260 = vmatpush.msra.mxu0 %v40
  %261 = vmatpush.msra.mxu0 %v39
  %262 = vmatpush.msra.mxu0 %v38
  %263 = vmatpush.msra.mxu0 %v37
  %264 = vmatpush.msra.mxu0 %v36
  %265 = vmatpush.msra.mxu0 %v35
  %266 = vmatpush.msra.mxu0 %v34
  %267 = vmatpush.msra.mxu0 %v33
  %268 = vmatpush.msra.mxu0 %v32
  %269 = vmatpush.msra.mxu0 %v31
  %270 = vmatpush.msra.mxu0 %v30
  %271 = vmatpush.msra.mxu0 %v29
  %272 = vmatpush.msra.mxu0 %v28
  %273 = vmatpush.msra.mxu0 %v27
  %274 = vmatpush.msra.mxu0 %v26
  %275 = vmatmul.f32.gmra.mxu0 %v257
  %v276 = vpop.f32.mrf.mxu0
  %v277 = vadd.f32 %v79, %v276
  %278 = vmatmul.f32.gmra.mxu0 %v258
  %v279 = vpop.f32.mrf.mxu0
  %v280 = vadd.f32 %v82, %v279
  %281 = vdwg.mxu0
  %v282 = vtanh.pop %v277
  %v283 = vtanh.pop %v280
  %284 = vmatpush.msra.mxu0 %v41
  %285 = vmatpush.msra.mxu0 %v40
  %286 = vmatpush.msra.mxu0 %v39
  %287 = vmatpush.msra.mxu0 %v38
  %288 = vmatpush.msra.mxu0 %v37
  %289 = vmatpush.msra.mxu0 %v36
  %290 = vmatpush.msra.mxu0 %v35
  %291 = vmatpush.msra.mxu0 %v34
  %292 = vmatpush.msra.mxu0 %v33
  %293 = vmatpush.msra.mxu0 %v32
  %294 = vmatpush.msra.mxu0 %v31
  %295 = vmatpush.msra.mxu0 %v30
  %296 = vmatpush.msra.mxu0 %v29
  %297 = vmatpush.msra.mxu0 %v28
  %298 = vmatpush.msra.mxu0 %v27
  %299 = vmatpush.msra.mxu0 %v26
  %300 = vmatmul.f32.gmra.mxu0 %v282
  %v301 = vpop.f32.mrf.mxu0
  %v302 = vadd.f32 %v79, %v301
  %303 = vmatmul.f32.gmra.mxu0 %v283
  %v304 = vpop.f32.mrf.mxu0
  %v305 = vadd.f32 %v82, %v304
  %306 = vdwg.mxu0
  %v307 = vtanh.pop %v302
  %v308 = vtanh.pop %v305
  %309 = vmatpush.msra.mxu0 %v41
  %310 = vmatpush.msra.mxu0 %v40
  %311 = vmatpush.msra.mxu0 %v39
  %312 = vmatpush.msra.mxu0 %v38
  %313 = vmatpush.msra.mxu0 %v37
  %314 = vmatpush.msra.mxu0 %v36
  %315 = vmatpush.msra.mxu0 %v35
  %316 = vmatpush.msra.mxu0 %v34
  %317 = vmatpush.msra.mxu0 %v33
  %318 = vmatpush.msra.mxu0 %v32
  %319 = vmatpush.msra.mxu0 %v31
  %320 = vmatpush.msra.mxu0 %v30
  %321 = vmatpush.msra.mxu0 %v29
  %322 = vmatpush.msra.mxu0 %v28
  %323 = vmatpush.msra.mxu0 %v27
  %324 = vmatpush.msra.mxu0 %v26
  %325 = vmatmul.f32.gmra.mxu0 %v307
  %v326 = vpop.f32.mrf.mxu0
  %v327 = vadd.f32 %v79, %v326
  %328 = vmatmul.f32.gmra.mxu0 %v308
  %v329 = vpop.f32.mrf.mxu0
  %v330 = vadd.f32 %v82, %v329
  %331 = vdwg.mxu0
  %v332 = vtanh.pop %v327
  %v333 = vtanh.pop %v330
  %334 = vmatpush.msra.mxu0 %v41
  %335 = vmatpush.msra.mxu0 %v40
  %336 = vmatpush.msra.mxu0 %v39
  %337 = vmatpush.msra.mxu0 %v38
  %338 = vmatpush.msra.mxu0 %v37
  %339 = vmatpush.msra.mxu0 %v36
  %340 = vmatpush.msra.mxu0 %v35
  %341 = vmatpush.msra.mxu0 %v34
  %342 = vmatpush.msra.mxu0 %v33
  %343 = vmatpush.msra.mxu0 %v32
  %344 = vmatpush.msra.mxu0 %v31
  %345 = vmatpush.msra.mxu0 %v30
  %346 = vmatpush.msra.mxu0 %v29
  %347 = vmatpush.msra.mxu0 %v28
  %348 = vmatpush.msra.mxu0 %v27
  %349 = vmatpush.msra.mxu0 %v26
  %350 = vmatmul.f32.gmra.mxu0 %v332
  %v351 = vpop.f32.mrf.mxu0
  %v352 = vadd.f32 %v79, %v351
  %353 = vmatmul.f32.gmra.mxu0 %v333
  %v354 = vpop.f32.mrf.mxu0
  %v355 = vadd.f32 %v82, %v354
  %356 = vdwg.mxu0
  %v357 = vtanh.pop %v352
  %v358 = vtanh.pop %v355
  %359 = vmatpush.msra.mxu0 %v41
  %360 = vmatpush.msra.mxu0 %v40
  %361 = vmatpush.msra.mxu0 %v39
  %362 = vmatpush.msra.mxu0 %v38
  %363 = vmatpush.msra.mxu0 %v37
  %364 = vmatpush.msra.mxu0 %v36
  %365 = vmatpush.msra.mxu0 %v35
  %366 = vmatpush.msra.mxu0 %v34
  %367 = vmatpush.msra.mxu0 %v33
  %368 = vmatpush.msra.mxu0 %v32
  %369 = vmatpush.msra.mxu0 %v31
  %370 = vmatpush.msra.mxu0 %v30
  %371 = vmatpush.msra.mxu0 %v29
  %372 = vmatpush.msra.mxu0 %v28
  %373 = vmatpush.msra.mxu0 %v27
  %374 = vmatpush.msra.mxu0 %v26
  %375 = vmatmul.f32.gmra.mxu0 %v357
  %v376 = vpop.f32.mrf.mxu0
  %v377 = vadd.f32 %v79, %v376
  %378 = vmatmul.f32.gmra.mxu0 %v358
  %v379 = vpop.f32.mrf.mxu0
  %v380 = vadd.f32 %v82, %v379
  %381 = vdwg.mxu0
  %v382 = vtanh.pop %v377
  %v383 = vtanh.pop %v380
  %384 = vmatpush.msra.mxu0 %v41
  %385 = vmatpush.msra.mxu0 %v40
  %386 = vmatpush.msra.mxu0 %v39
  %387 = vmatpush.msra.mxu0 %v38
  %388 = vmatpush.msra.mxu0 %v37
  %389 = vmatpush.msra.mxu0 %v36
  %390 = vmatpush.msra.mxu0 %v35
  %391 = vmatpush.msra.mxu0 %v34
  %392 = vmatpush.msra.mxu0 %v33
  %393 = vmatpush.msra.mxu0 %v32
  %394 = vmatpush.msra.mxu0 %v31
  %395 = vmatpush.msra.mxu0 %v30
  %396 = vmatpush.msra.mxu0 %v29
  %397 = vmatpush.msra.mxu0 %v28
  %398 = vmatpush.msra.mxu0 %v27
  %399 = vmatpush.msra.mxu0 %v26
  %400 = vmatmul.f32.gmra.mxu0 %v382
  %v401 = vpop.f32.mrf.mxu0
  %v402 = vadd.f32 %v79, %v401
  %403 = vmatmul.f32.gmra.mxu0 %v383
  %v404 = vpop.f32.mrf.mxu0
  %v405 = vadd.f32 %v82, %v404
  %406 = vdwg.mxu0
  %v407 = vtanh.pop %v402
  %v408 = vtanh.pop %v405
  %409 = vmatpush.msra.mxu0 %v41
  %410 = vmatpush.msra.mxu0 %v40
  %411 = vmatpush.msra.mxu0 %v39
  %412 = vmatpush.msra.mxu0 %v38
  %413 = vmatpush.msra.mxu0 %v37
  %414 = vmatpush.msra.mxu0 %v36
  %415 = vmatpush.msra.mxu0 %v35
  %416 = vmatpush.msra.mxu0 %v34
  %417 = vmatpush.msra.mxu0 %v33
  %418 = vmatpush.msra.mxu0 %v32
  %419 = vmatpush.msra.mxu0 %v31
  %420 = vmatpush.msra.mxu0 %v30
  %421 = vmatpush.msra.mxu0 %v29
  %422 = vmatpush.msra.mxu0 %v28
  %423 = vmatpush.msra.mxu0 %v27
  %424 = vmatpush.msra.mxu0 %v26
  %425 = vmatmul.f32.gmra.mxu0 %v407
  %v426 = vpop.f32.mrf.mxu0
  %v427 = vadd.f32 %v79, %v426
  %428 = vmatmul.f32.gmra.mxu0 %v408
  %v429 = vpop.f32.mrf.mxu0
  %v430 = vadd.f32 %v82, %v429
  %431 = vdwg.mxu0
  %v432 = vtanh.pop %v427
  %v433 = vtanh.pop %v430
  %434 = vmatpush.msra.mxu0 %v41
  %435 = vmatpush.msra.mxu0 %v40
  %436 = vmatpush.msra.mxu0 %v39
  %437 = vmatpush.msra.mxu0 %v38
  %438 = vmatpush.msra.mxu0 %v37
  %439 = vmatpush.msra.mxu0 %v36
  %440 = vmatpush.msra.mxu0 %v35
  %441 = vmatpush.msra.mxu0 %v34
  %442 = vmatpush.msra.mxu0 %v33
  %443 = vmatpush.msra.mxu0 %v32
  %444 = vmatpush.msra.mxu0 %v31
  %445 = vmatpush.msra.mxu0 %v30
  %446 = vmatpush.msra.mxu0 %v29
  %447 = vmatpush.msra.mxu0 %v28
  %448 = vmatpush.msra.mxu0 %v27
  %449 = vmatpush.msra.mxu0 %v26
  %450 = vmatmul.f32.gmra.mxu0 %v432
  %v451 = vpop.f32.mrf.mxu0
  %v452 = vadd.f32 %v79, %v451
  %453 = vmatmul.f32.gmra.mxu0 %v433
  %v454 = vpop.f32.mrf.mxu0
  %v455 = vadd.f32 %v82, %v454
  %456 = vdwg.mxu0
  %v457 = vtanh.pop %v452
  %v458 = vtanh.pop %v455
  %459 = vmatpush.msra.mxu0 %v41
  %460 = vmatpush.msra.mxu0 %v40
  %461 = vmatpush.msra.mxu0 %v39
  %462 = vmatpush.msra.mxu0 %v38
  %463 = vmatpush.msra.mxu0 %v37
  %464 = vmatpush.msra.mxu0 %v36
  %465 = vmatpush.msra.mxu0 %v35
  %466 = vmatpush.msra.mxu0 %v34
  %467 = vmatpush.msra.mxu0 %v33
  %468 = vmatpush.msra.mxu0 %v32
  %469 = vmatpush.msra.mxu0 %v31
  %470 = vmatpush.msra.mxu0 %v30
  %471 = vmatpush.msra.mxu0 %v29
  %472 = vmatpush.msra.mxu0 %v28
  %473 = vmatpush.msra.mxu0 %v27
  %474 = vmatpush.msra.mxu0 %v26
  %475 = vmatmul.f32.gmra.mxu0 %v457
  %v476 = vpop.f32.mrf.mxu0
  %v477 = vadd.f32 %v79, %v476
  %478 = vmatmul.f32.gmra.mxu0 %v458
  %v479 = vpop.f32.mrf.mxu0
  %v480 = vadd.f32 %v82, %v479
  %481 = vdwg.mxu0
  %v482 = vtanh.pop %v477
  %v483 = vtanh.pop %v480
  %484 = vmatpush.msra.mxu0 %v41
  %485 = vmatpush.msra.mxu0 %v40
  %486 = vmatpush.msra.mxu0 %v39
  %487 = vmatpush.msra.mxu0 %v38
  %488 = vmatpush.msra.mxu0 %v37
  %489 = vmatpush.msra.mxu0 %v36
  %490 = vmatpush.msra.mxu0 %v35
  %491 = vmatpush.msra.mxu0 %v34
  %492 = vmatpush.msra.mxu0 %v33
  %493 = vmatpush.msra.mxu0 %v32
  %494 = vmatpush.msra.mxu0 %v31
  %495 = vmatpush.msra.mxu0 %v30
  %496 = vmatpush.msra.mxu0 %v29
  %497 = vmatpush.msra.mxu0 %v28
  %498 = vmatpush.msra.mxu0 %v27
  %499 = vmatpush.msra.mxu0 %v26
  %500 = vmatmul.f32.gmra.mxu0 %v482
  %v501 = vpop.f32.mrf.mxu0
  %v502 = vadd.f32 %v79, %v501
  %503 = vmatmul.f32.gmra.mxu0 %v483
  %v504 = vpop.f32.mrf.mxu0
  %v505 = vadd.f32 %v82, %v504
  %506 = vdwg.mxu0
  %v507 = vtanh.pop %v502
  %v508 = vtanh.pop %v505
  %509 = vmatpush.msra.mxu0 %v41
  %510 = vmatpush.msra.mxu0 %v40
  %511 = vmatpush.msra.mxu0 %v39
  %512 = vmatpush.msra.mxu0 %v38
  %513 = vmatpush.msra.mxu0 %v37
  %514 = vmatpush.msra.mxu0 %v36
  %515 = vmatpush.msra.mxu0 %v35
  %516 = vmatpush.msra.mxu0 %v34
  %517 = vmatpush.msra.mxu0 %v33
  %518 = vmatpush.msra.mxu0 %v32
  %519 = vmatpush.msra.mxu0 %v31
  %520 = vmatpush.msra.mxu0 %v30
  %521 = vmatpush.msra.mxu0 %v29
  %522 = vmatpush.msra.mxu0 %v28
  %523 = vmatpush.msra.mxu0 %v27
  %524 = vmatpush.msra.mxu0 %v26
  %525 = vmatmul.f32.gmra.mxu0 %v507
  %v526 = vpop.f32.mrf.mxu0
  %v527 = vadd.f32 %v79, %v526
  %528 = vmatmul.f32.gmra.mxu0 %v508
  %v529 = vpop.f32.mrf.mxu0
  %v530 = vadd.f32 %v82, %v529
  %531 = vdwg.mxu0
  %v532 = vtanh.pop %v527
  %v533 = vtanh.pop %v530
  %534 = vmatpush.msra.mxu0 %v41
  %535 = vmatpush.msra.mxu0 %v40
  %536 = vmatpush.msra.mxu0 %v39
  %537 = vmatpush.msra.mxu0 %v38
  %538 = vmatpush.msra.mxu0 %v37
  %539 = vmatpush.msra.mxu0 %v36
  %540 = vmatpush.msra.mxu0 %v35
  %541 = vmatpush.msra.mxu0 %v34
  %542 = vmatpush.msra.mxu0 %v33
  %543 = vmatpush.msra.mxu0 %v32
  %544 = vmatpush.msra.mxu0 %v31
  %545 = vmatpush.msra.mxu0 %v30
  %546 = vmatpush.msra.mxu0 %v29
  %547 = vmatpush.msra.mxu0 %v28
  %548 = vmatpush.msra.mxu0 %v27
  %549 = vmatpush.msra.mxu0 %v26
  %550 = vmatmul.f32.gmra.mxu0 %v532
  %v551 = vpop.f32.mrf.mxu0
  %v552 = vadd.f32 %v79, %v551
  %553 = vmatmul.f32.gmra.mxu0 %v533
  %v554 = vpop.f32.mrf.mxu0
  %v555 = vadd.f32 %v82, %v554
  %556 = vdwg.mxu0
  %v557 = vtanh.pop %v552
  %v558 = vtanh.pop %v555
  %559 = vmatpush.msra.mxu0 %v41
  %560 = vmatpush.msra.mxu0 %v40
  %561 = vmatpush.msra.mxu0 %v39
  %562 = vmatpush.msra.mxu0 %v38
  %563 = vmatpush.msra.mxu0 %v37
  %564 = vmatpush.msra.mxu0 %v36
  %565 = vmatpush.msra.mxu0 %v35
  %566 = vmatpush.msra.mxu0 %v34
  %567 = vmatpush.msra.mxu0 %v33
  %568 = vmatpush.msra.mxu0 %v32
  %569 = vmatpush.msra.mxu0 %v31
  %570 = vmatpush.msra.mxu0 %v30
  %571 = vmatpush.msra.mxu0 %v29
  %572 = vmatpush.msra.mxu0 %v28
  %573 = vmatpush.msra.mxu0 %v27
  %574 = vmatpush.msra.mxu0 %v26
  %575 = vmatmul.f32.gmra.mxu0 %v557
  %v576 = vpop.f32.mrf.mxu0
  %v577 = vadd.f32 %v79, %v576
  %578 = vmatmul.f32.gmra.mxu0 %v558
  %v579 = vpop.f32.mrf.mxu0
  %v580 = vadd.f32 %v82, %v579
  %581 = vdwg.mxu0
  %v582 = vtanh.pop %v577
  %v583 = vtanh.pop %v580
  %584 = vmatpush.msra.mxu0 %v41
  %585 = vmatpush.msra.mxu0 %v40
  %586 = vmatpush.msra.mxu0 %v39
  %587 = vmatpush.msra.mxu0 %v38
  %588 = vmatpush.msra.mxu0 %v37
  %589 = vmatpush.msra.mxu0 %v36
  %590 = vmatpush.msra.mxu0 %v35
  %591 = vmatpush.msra.mxu0 %v34
  %592 = vmatpush.msra.mxu0 %v33
  %593 = vmatpush.msra.mxu0 %v32
  %594 = vmatpush.msra.mxu0 %v31
  %595 = vmatpush.msra.mxu0 %v30
  %596 = vmatpush.msra.mxu0 %v29
  %597 = vmatpush.msra.mxu0 %v28
  %598 = vmatpush.msra.mxu0 %v27
  %599 = vmatpush.msra.mxu0 %v26
  %600 = vmatmul.f32.gmra.mxu0 %v582
  %v601 = vpop.f32.mrf.mxu0
  %v602 = vadd.f32 %v79, %v601
  %603 = vmatmul.f32.gmra.mxu0 %v583
  %v604 = vpop.f32.mrf.mxu0
  %v605 = vadd.f32 %v82, %v604
  %606 = vdwg.mxu0
  %v607 = vtanh.pop %v602
  %v608 = vtanh.pop %v605
  %609 = vmatpush.msra.mxu0 %v41
  %610 = vmatpush.msra.mxu0 %v40
  %611 = vmatpush.msra.mxu0 %v39
  %612 = vmatpush.msra.mxu0 %v38
  %613 = vmatpush.msra.mxu0 %v37
  %614 = vmatpush.msra.mxu0 %v36
  %615 = vmatpush.msra.mxu0 %v35
  %616 = vmatpush.msra.mxu0 %v34
  %617 = vmatpush.msra.mxu0 %v33
  %618 = vmatpush.msra.mxu0 %v32
  %619 = vmatpush.msra.mxu0 %v31
  %620 = vmatpush.msra.mxu0 %v30
  %621 = vmatpush.msra.mxu0 %v29
  %622 = vmatpush.msra.mxu0 %v28
  %623 = vmatpush.msra.mxu0 %v27
  %624 = vmatpush.msra.mxu0 %v26
  %625 = vmatmul.f32.gmra.mxu0 %v607
  %v626 = vpop.f32.mrf.mxu0
  %v627 = vadd.f32 %v79, %v626
  %628 = vmatmul.f32.gmra.mxu0 %v608
  %v629 = vpop.f32.mrf.mxu0
  %v630 = vadd.f32 %v82, %v629
  %631 = vdwg.mxu0
  %v632 = vtanh.pop %v627
  %v633 = vtanh.pop %v630
  %634 = vmatpush.msra.mxu0 %v41
  %635 = vmatpush.msra.mxu0 %v40
  %636 = vmatpush.msra.mxu0 %v39
  %637 = vmatpush.msra.mxu0 %v38
  %638 = vmatpush.msra.mxu0 %v37
  %639 = vmatpush.msra.mxu0 %v36
  %640 = vmatpush.msra.mxu0 %v35
  %641 = vmatpush.msra.mxu0 %v34
  %642 = vmatpush.msra.mxu0 %v33
  %643 = vmatpush.msra.mxu0 %v32
  %644 = vmatpush.msra.mxu0 %v31
  %645 = vmatpush.msra.mxu0 %v30
  %646 = vmatpush.msra.mxu0 %v29
  %647 = vmatpush.msra.mxu0 %v28
  %648 = vmatpush.msra.mxu0 %v27
  %649 = vmatpush.msra.mxu0 %v26
  %650 = vmatmul.f32.gmra.mxu0 %v632
  %v651 = vpop.f32.mrf.mxu0
  %v652 = vadd.f32 %v79, %v651
  %653 = vmatmul.f32.gmra.mxu0 %v633
  %v654 = vpop.f32.mrf.mxu0
  %v655 = vadd.f32 %v82, %v654
  %656 = vdwg.mxu0
  %v657 = vtanh.pop %v652
  %v658 = vtanh.pop %v655
  %659 = vmatpush.msra.mxu0 %v41
  %660 = vmatpush.msra.mxu0 %v40
  %661 = vmatpush.msra.mxu0 %v39
  %662 = vmatpush.msra.mxu0 %v38
  %663 = vmatpush.msra.mxu0 %v37
  %664 = vmatpush.msra.mxu0 %v36
  %665 = vmatpush.msra.mxu0 %v35
  %666 = vmatpush.msra.mxu0 %v34
  %667 = vmatpush.msra.mxu0 %v33
  %668 = vmatpush.msra.mxu0 %v32
  %669 = vmatpush.msra.mxu0 %v31
  %670 = vmatpush.msra.mxu0 %v30
  %671 = vmatpush.msra.mxu0 %v29
  %672 = vmatpush.msra.mxu0 %v28
  %673 = vmatpush.msra.mxu0 %v27
  %674 = vmatpush.msra.mxu0 %v26
  %675 = vmatmul.f32.gmra.mxu0 %v657
  %v676 = vpop.f32.mrf.mxu0
  %v677 = vadd.f32 %v79, %v676
  %678 = vmatmul.f32.gmra.mxu0 %v658
  %v679 = vpop.f32.mrf.mxu0
  %v680 = vadd.f32 %v82, %v679
  %681 = vdwg.mxu0
  %v682 = vtanh.pop %v677
  %v683 = vtanh.pop %v680
  %v684 = vperm.slane %v59, 0
  %685 = vmatpush.msra.mxu0 %v58
  %686 = vmatpush.msra.mxu0 %v57
  %687 = vmatpush.msra.mxu0 %v56
  %688 = vmatpush.msra.mxu0 %v55
  %689 = vmatpush.msra.mxu0 %v54
  %690 = vmatpush.msra.mxu0 %v53
  %691 = vmatpush.msra.mxu0 %v52
  %692 = vmatpush.msra.mxu0 %v51
  %693 = vmatpush.msra.mxu0 %v50
  %694 = vmatpush.msra.mxu0 %v49
  %695 = vmatpush.msra.mxu0 %v48
  %696 = vmatpush.msra.mxu0 %v47
  %697 = vmatpush.msra.mxu0 %v46
  %698 = vmatpush.msra.mxu0 %v45
  %699 = vmatpush.msra.mxu0 %v44
  %700 = vmatpush.msra.mxu0 %v43
  %701 = vmatmul.f32.gmra.mxu0 %v682
  %v702 = vpop.f32.mrf.mxu0
  %v703 = vadd.f32 %v684, %v702
  %704 = vmatmul.f32.gmra.mxu0 %v683
  %v705 = vpop.f32.mrf.mxu0
  %v706 = vadd.f32 %v684, %v705
  %707 = vdwg.mxu0
  %v708 = vadd.f32 %v682, %v703
  %v709 = vadd.f32 %v683, %v706
  %710 = vst [vmem:[%s1] sm:$0xff] %v708
  %711 = vst [vmem:[%s1 + $0x8] sm:$0xff] %v709
  // Predicated region
  $region6: #{deq_implicit_nn_forward.1} parent=0 // pred_check
    _
  $region7: #{deq_implicit_nn_forward.1} parent=0 // pred_check_branch
    %713 = sbr.rel (0) target = $region9
  $region8: #{deq_implicit_nn_forward.1} parent=0 // pred_region
    _
  $region9: #{deq_implicit_nn_forward.1} parent=0 // pred_fallthru
    _
  // Predicated region
  $region10: #{deq_implicit_nn_forward.1} parent=0 // pred_check
    _
  $region11: #{deq_implicit_nn_forward.1} parent=0 // pred_check_branch
    %715 = sbr.rel (0) target = $region13
  $region12: #{deq_implicit_nn_forward.1} parent=0 // pred_region
    _
  $region13: #{deq_implicit_nn_forward.1} parent=0 // pred_fallthru
    _

</llo_original>
